<compile_context>
chip_gen: v6e
topology: v6e:2x2x1
jax: 0.10.0
libtpu: 0.0.40
codegen_flags: <defaults>
</compile_context>

<pallas_src>
import functools
import math

import jax
import jax.numpy as jnp
from jax.experimental import pallas as pl
from jax.experimental.pallas import tpu as pltpu

_LANE = 128
_SUBLANE = 8
_VMEM_BLOCK_BUDGET = 24 * 1024 * 1024   # double-buffered in+out blocks, v7x-safe
_VMEM_LIMIT_BYTES = 32 * 1024 * 1024    # raise v5e's 16 MiB scoped default


def _round_up(x, m):
    return ((x + m - 1) // m) * m


def _pick_row_tile(R, W, W_out, itemsize):
    """Largest row tile (multiple of 8) whose double-buffered, lane-padded
    input+output blocks fit the VMEM budget."""
    w_in_pad = _round_up(W, _LANE)       # VMEM lane-pads the last dim to 128
    w_out_pad = _round_up(W_out, _LANE)
    bytes_per_row = 2 * (w_in_pad + w_out_pad) * itemsize   # 2x = double buffer
    tr_cap = max(_SUBLANE,
                 (_VMEM_BLOCK_BUDGET // bytes_per_row) // _SUBLANE * _SUBLANE)
    tr = min(tr_cap, _round_up(R, _SUBLANE))
    # v7x megacore: for large problems keep >= 2 grid steps so the "parallel"
    # row axis can shard across the two TensorCores (no-op on v5e/v6e).
    if R >= 4096:
        tr = min(tr, _round_up(-(-R // 2), _SUBLANE))
    return max(tr, _SUBLANE)


def _circ_pad_kernel(x_ref, o_ref, *, W, p):
    # x_ref: (tr, W), o_ref: (tr, W + 2p).
    # Build the padded row in registers, write it with ONE full-tile store.
    x = x_ref[...]
    o_ref[...] = jnp.concatenate([x[:, W - p:W], x, x[:, 0:p]], axis=1)


def custom_pad2d_transp(x, kern_size):
    """Circular pad along the last dim only.
    Matches nn.functional.pad(x, (p, p, 0, 0), mode='circular')."""
    p = int((kern_size - 1) / 2)
    W = x.shape[-1]
    if p == 0:
        return x
    if p > W:
        # PyTorch circular padding requires pad <= input size on that dim.
        raise ValueError(f"circular pad {p} exceeds last-dim size {W}")

    lead = x.shape[:-1]
    R = math.prod(lead) if lead else 1
    W_out = W + 2 * p
    x2 = x.reshape(R, W)

    tr = _pick_row_tile(R, W, W_out, x.dtype.itemsize)
    grid = pl.cdiv(R, tr)   # ragged last block is masked by Pallas

    kernel = functools.partial(_circ_pad_kernel, W=W, p=p)

    out2 = pl.pallas_call(
        kernel,
        out_shape=jax.ShapeDtypeStruct((R, W_out), x.dtype),
        grid_spec=pltpu.PrefetchScalarGridSpec(
            num_scalar_prefetch=0,
            grid=(grid,),
            in_specs=[pl.BlockSpec((tr, W), lambda i: (i, 0))],
            out_specs=pl.BlockSpec((tr, W_out), lambda i: (i, 0)),
        ),
        compiler_params=pltpu.CompilerParams(
            dimension_semantics=("parallel",),
            vmem_limit_bytes=_VMEM_LIMIT_BYTES,
        ),
    )(x2)

    return out2.reshape(*lead, W_out)


if __name__ == "__main__":
    key = jax.random.PRNGKey(0)

    # Demo shape implied by the 4-D (NCHW) module: batch=2, channels=4, 16x16.
    N, C, H, W = 2, 4, 16, 16
    kern_size = 3  # -> p = 1
    x = jax.random.normal(key, (N, C, H, W), dtype=jnp.float32)

    out = custom_pad2d_transp(x, kern_size)
    out = jax.block_until_ready(out)

    p = (kern_size - 1) // 2
    ref = jnp.pad(x, ((0, 0), (0, 0), (0, 0), (p, p)), mode="wrap")
    assert out.shape == (N, C, H, W + 2 * p), out.shape
    assert jnp.allclose(out, ref), "mismatch vs. reference circular pad"

    # Second check: odd leading dims (R not a multiple of 8 -> ragged block)
    # and a wider pad (kern_size=5 -> p=2).
    x2 = jax.random.normal(jax.random.PRNGKey(1), (3, 5, 7, 16), jnp.float32)
    out2 = jax.block_until_ready(custom_pad2d_transp(x2, 5))
    ref2 = jnp.pad(x2, ((0, 0), (0, 0), (0, 0), (2, 2)), mode="wrap")
    assert out2.shape == ref2.shape, out2.shape
    assert jnp.allclose(out2, ref2), "mismatch on ragged-block case"

    print("KERNEL_OK")
</pallas_src>

<mosaic_0001>
module attributes {stable_mosaic.version = 11 : i64} {
  func.func @_circ_pad_kernel(%arg0: i32, %arg1: memref<128x16xf32, #tpu.memory_space<vmem>>, %arg2: memref<128x18xf32, #tpu.memory_space<vmem>>) attributes {dimension_semantics = [#tpu.dimension_semantics<parallel>], iteration_bounds = array<i64: 1>, scalar_prefetch = 0 : i64, scratch_operands = 0 : i64, tpu.core_type = #tpu.core_type<tc>, window_params = [{transform_indices = @transform_0, window_bounds = array<i64: 128, 16>}, {transform_indices = @transform_1, window_bounds = array<i64: 128, 18>}]} {
    %c0 = arith.constant 0 : index
    %c0_0 = arith.constant 0 : index
    %0 = vector.load %arg1[%c0, %c0_0] : memref<128x16xf32, #tpu.memory_space<vmem>>, vector<128x16xf32>
    %1 = vector.extract_strided_slice %0 {offsets = [0, 15], sizes = [128, 1], strides = [1, 1]} : vector<128x16xf32> to vector<128x1xf32>
    %2 = vector.extract_strided_slice %0 {offsets = [0, 0], sizes = [128, 1], strides = [1, 1]} : vector<128x16xf32> to vector<128x1xf32>
    %3 = tpu.concatenate %1, %0, %2 in 1 : vector<128x1xf32>, vector<128x16xf32>, vector<128x1xf32> -> vector<128x18xf32>
    %c0_1 = arith.constant 0 : index
    %c0_2 = arith.constant 0 : index
    %4 = vector.load %arg2[%c0_1, %c0_2] : memref<128x18xf32, #tpu.memory_space<vmem>>, vector<128x18xf32>
    tpu.vector_store %arg2[%c0_1, %c0_2], %3 {strides = array<i32>} : memref<128x18xf32, #tpu.memory_space<vmem>>, vector<128x18xf32>,
    return
  }
  func.func @transform_0(%arg0: i32) -> (i32, i32) {
    %c0_i32 = arith.constant 0 : i32
    %c0_i32_0 = arith.constant 0 : i32
    return %arg0, %c0_i32 : i32, i32
  }
  func.func @transform_1(%arg0: i32) -> (i32, i32) {
    %c0_i32 = arith.constant 0 : i32
    %c0_i32_0 = arith.constant 0 : i32
    return %arg0, %c0_i32 : i32, i32
  }
}

</mosaic_0001>

<llo_original>
// kernel: tpu_custom_call.1
$region0: #{tpu_custom_call.1}
  #allocation0 [shape = 'u32[]', space=smem, size = 0x4, offset = 0x4, fixed_abs, tag = 'smem constant byte address 0x4 - core index']
  #allocation1 [shape = 'u32[144,128]{1,0:T(1,128)}', space=vmem, size = 0x12000, scoped, tag = 'internal scratch']
  %s0 = inlined_call_operand.vmem [shape: f32[128,16], index: 0, kind: input, shape index: {}]
  %s1 = inlined_call_operand.vmem [shape: f32[128,18], index: 1, kind: output, shape index: {}]
  %s2 = sld [smem:[#allocation0]]
  $region14: #{tpu_custom_call.1} parent=0
    _
  %s4 = ssub.s32 1, %s2
  %s5 = scalar_select 0, %s4, %s2
  // Predicated region
  $region2: #{tpu_custom_call.1} parent=0 // pred_check
    _
  $region3: #{tpu_custom_call.1} parent=0 // pred_check_branch
    %7 = sbr.rel (0) target = $region5
  $region4: #{tpu_custom_call.1} parent=0 // pred_region
    _
  $region5: #{tpu_custom_call.1} parent=0 // pred_fallthru
    _
  %v8 = vld [vmem:[%s0] sm:$0xff]
  %v9 = vld [vmem:[%s0 + $0x8] sm:$0xff]
  %v10 = vld [vmem:[%s0 + $0x10] sm:$0xff]
  %v11 = vld [vmem:[%s0 + $0x18] sm:$0xff]
  %v12 = vld [vmem:[%s0 + $0x20] sm:$0xff]
  %v13 = vld [vmem:[%s0 + $0x28] sm:$0xff]
  %v14 = vld [vmem:[%s0 + $0x30] sm:$0xff]
  %v15 = vld [vmem:[%s0 + $0x38] sm:$0xff]
  %v16 = vld [vmem:[%s0 + $0x40] sm:$0xff]
  %v17 = vld [vmem:[%s0 + $0x48] sm:$0xff]
  %v18 = vld [vmem:[%s0 + $0x50] sm:$0xff]
  %v19 = vld [vmem:[%s0 + $0x58] sm:$0xff]
  %v20 = vld [vmem:[%s0 + $0x60] sm:$0xff]
  %v21 = vld [vmem:[%s0 + $0x68] sm:$0xff]
  %v22 = vld [vmem:[%s0 + $0x70] sm:$0xff]
  %v23 = vld [vmem:[%s0 + $0x78] sm:$0xff]
  %40 = vrot.lane.b32.xlu0 %v8, 113
  %v41 = vpop.permute.xlu0 %40
  %42 = vrot.lane.b32.xlu0 %v9, 113
  %v43 = vpop.permute.xlu0 %42
  %44 = vrot.lane.b32.xlu0 %v10, 113
  %v45 = vpop.permute.xlu0 %44
  %46 = vrot.lane.b32.xlu0 %v11, 113
  %v47 = vpop.permute.xlu0 %46
  %48 = vrot.lane.b32.xlu0 %v12, 113
  %v49 = vpop.permute.xlu0 %48
  %50 = vrot.lane.b32.xlu0 %v13, 113
  %v51 = vpop.permute.xlu0 %50
  %52 = vrot.lane.b32.xlu0 %v14, 113
  %v53 = vpop.permute.xlu0 %52
  %54 = vrot.lane.b32.xlu0 %v15, 113
  %v55 = vpop.permute.xlu0 %54
  %56 = vrot.lane.b32.xlu0 %v16, 113
  %v57 = vpop.permute.xlu0 %56
  %58 = vrot.lane.b32.xlu0 %v17, 113
  %v59 = vpop.permute.xlu0 %58
  %60 = vrot.lane.b32.xlu0 %v18, 113
  %v61 = vpop.permute.xlu0 %60
  %62 = vrot.lane.b32.xlu0 %v19, 113
  %v63 = vpop.permute.xlu0 %62
  %64 = vrot.lane.b32.xlu0 %v20, 113
  %v65 = vpop.permute.xlu0 %64
  %66 = vrot.lane.b32.xlu0 %v21, 113
  %v67 = vpop.permute.xlu0 %66
  %68 = vrot.lane.b32.xlu0 %v22, 113
  %v69 = vpop.permute.xlu0 %68
  %70 = vrot.lane.b32.xlu0 %v23, 113
  %v71 = vpop.permute.xlu0 %70
  %88 = vrot.lane.b32.xlu0 %v8, 1
  %v89 = vpop.permute.xlu0 %88
  %90 = vrot.lane.b32.xlu0 %v9, 1
  %v91 = vpop.permute.xlu0 %90
  %92 = vrot.lane.b32.xlu0 %v10, 1
  %v93 = vpop.permute.xlu0 %92
  %94 = vrot.lane.b32.xlu0 %v11, 1
  %v95 = vpop.permute.xlu0 %94
  %96 = vrot.lane.b32.xlu0 %v12, 1
  %v97 = vpop.permute.xlu0 %96
  %98 = vrot.lane.b32.xlu0 %v13, 1
  %v99 = vpop.permute.xlu0 %98
  %100 = vrot.lane.b32.xlu0 %v14, 1
  %v101 = vpop.permute.xlu0 %100
  %102 = vrot.lane.b32.xlu0 %v15, 1
  %v103 = vpop.permute.xlu0 %102
  %104 = vrot.lane.b32.xlu0 %v16, 1
  %v105 = vpop.permute.xlu0 %104
  %106 = vrot.lane.b32.xlu0 %v17, 1
  %v107 = vpop.permute.xlu0 %106
  %108 = vrot.lane.b32.xlu0 %v18, 1
  %v109 = vpop.permute.xlu0 %108
  %110 = vrot.lane.b32.xlu0 %v19, 1
  %v111 = vpop.permute.xlu0 %110
  %112 = vrot.lane.b32.xlu0 %v20, 1
  %v113 = vpop.permute.xlu0 %112
  %114 = vrot.lane.b32.xlu0 %v21, 1
  %v115 = vpop.permute.xlu0 %114
  %116 = vrot.lane.b32.xlu0 %v22, 1
  %v117 = vpop.permute.xlu0 %116
  %118 = vrot.lane.b32.xlu0 %v23, 1
  %v119 = vpop.permute.xlu0 %118
  %136 = vrot.lane.b32.xlu0 %v8, 17
  %v137 = vpop.permute.xlu0 %136
  %138 = vrot.lane.b32.xlu0 %v9, 17
  %v139 = vpop.permute.xlu0 %138
  %140 = vrot.lane.b32.xlu0 %v10, 17
  %v141 = vpop.permute.xlu0 %140
  %142 = vrot.lane.b32.xlu0 %v11, 17
  %v143 = vpop.permute.xlu0 %142
  %144 = vrot.lane.b32.xlu0 %v12, 17
  %v145 = vpop.permute.xlu0 %144
  %146 = vrot.lane.b32.xlu0 %v13, 17
  %v147 = vpop.permute.xlu0 %146
  %148 = vrot.lane.b32.xlu0 %v14, 17
  %v149 = vpop.permute.xlu0 %148
  %150 = vrot.lane.b32.xlu0 %v15, 17
  %v151 = vpop.permute.xlu0 %150
  %152 = vrot.lane.b32.xlu0 %v16, 17
  %v153 = vpop.permute.xlu0 %152
  %154 = vrot.lane.b32.xlu0 %v17, 17
  %v155 = vpop.permute.xlu0 %154
  %156 = vrot.lane.b32.xlu0 %v18, 17
  %v157 = vpop.permute.xlu0 %156
  %158 = vrot.lane.b32.xlu0 %v19, 17
  %v159 = vpop.permute.xlu0 %158
  %160 = vrot.lane.b32.xlu0 %v20, 17
  %v161 = vpop.permute.xlu0 %160
  %162 = vrot.lane.b32.xlu0 %v21, 17
  %v163 = vpop.permute.xlu0 %162
  %164 = vrot.lane.b32.xlu0 %v22, 17
  %v165 = vpop.permute.xlu0 %164
  %166 = vrot.lane.b32.xlu0 %v23, 17
  %v167 = vpop.permute.xlu0 %166
  %vm184 = vcmask 7168
  %v185 = vsel %vm184, %v41, %v89
  %v186 = vsel %vm184, %v43, %v91
  %v187 = vsel %vm184, %v45, %v93
  %v188 = vsel %vm184, %v47, %v95
  %v189 = vsel %vm184, %v49, %v97
  %v190 = vsel %vm184, %v51, %v99
  %v191 = vsel %vm184, %v53, %v101
  %v192 = vsel %vm184, %v55, %v103
  %v193 = vsel %vm184, %v57, %v105
  %v194 = vsel %vm184, %v59, %v107
  %v195 = vsel %vm184, %v61, %v109
  %v196 = vsel %vm184, %v63, %v111
  %v197 = vsel %vm184, %v65, %v113
  %v198 = vsel %vm184, %v67, %v115
  %v199 = vsel %vm184, %v69, %v117
  %v200 = vsel %vm184, %v71, %v119
  %vm201 = vcmask 138240
  %v202 = vsel %vm201, %v185, %v137
  %v203 = vsel %vm201, %v186, %v139
  %v204 = vsel %vm201, %v187, %v141
  %v205 = vsel %vm201, %v188, %v143
  %v206 = vsel %vm201, %v189, %v145
  %v207 = vsel %vm201, %v190, %v147
  %v208 = vsel %vm201, %v191, %v149
  %v209 = vsel %vm201, %v192, %v151
  %v210 = vsel %vm201, %v193, %v153
  %v211 = vsel %vm201, %v194, %v155
  %v212 = vsel %vm201, %v195, %v157
  %v213 = vsel %vm201, %v196, %v159
  %v214 = vsel %vm201, %v197, %v161
  %v215 = vsel %vm201, %v198, %v163
  %v216 = vsel %vm201, %v199, %v165
  %v217 = vsel %vm201, %v200, %v167
  %vm218 = vcmask 146432
  %219 = vst.msk [vmem:[%s1] sm:$0xff] %vm218, %v202
  %220 = vst.msk [vmem:[%s1 + $0x8] sm:$0xff] %vm218, %v203
  %221 = vst.msk [vmem:[%s1 + $0x10] sm:$0xff] %vm218, %v204
  %222 = vst.msk [vmem:[%s1 + $0x18] sm:$0xff] %vm218, %v205
  %223 = vst.msk [vmem:[%s1 + $0x20] sm:$0xff] %vm218, %v206
  %224 = vst.msk [vmem:[%s1 + $0x28] sm:$0xff] %vm218, %v207
  %225 = vst.msk [vmem:[%s1 + $0x30] sm:$0xff] %vm218, %v208
  %226 = vst.msk [vmem:[%s1 + $0x38] sm:$0xff] %vm218, %v209
  %227 = vst.msk [vmem:[%s1 + $0x40] sm:$0xff] %vm218, %v210
  %228 = vst.msk [vmem:[%s1 + $0x48] sm:$0xff] %vm218, %v211
  %229 = vst.msk [vmem:[%s1 + $0x50] sm:$0xff] %vm218, %v212
  %230 = vst.msk [vmem:[%s1 + $0x58] sm:$0xff] %vm218, %v213
  %231 = vst.msk [vmem:[%s1 + $0x60] sm:$0xff] %vm218, %v214
  %232 = vst.msk [vmem:[%s1 + $0x68] sm:$0xff] %vm218, %v215
  %233 = vst.msk [vmem:[%s1 + $0x70] sm:$0xff] %vm218, %v216
  %234 = vst.msk [vmem:[%s1 + $0x78] sm:$0xff] %vm218, %v217
  // Predicated region
  $region6: #{tpu_custom_call.1} parent=0 // pred_check
    _
  $region7: #{tpu_custom_call.1} parent=0 // pred_check_branch
    %236 = sbr.rel (0) target = $region9
  $region8: #{tpu_custom_call.1} parent=0 // pred_region
    _
  $region9: #{tpu_custom_call.1} parent=0 // pred_fallthru
    _
  // Predicated region
  $region10: #{tpu_custom_call.1} parent=0 // pred_check
    _
  $region11: #{tpu_custom_call.1} parent=0 // pred_check_branch
    %238 = sbr.rel (0) target = $region13
  $region12: #{tpu_custom_call.1} parent=0 // pred_region
    _
  $region13: #{tpu_custom_call.1} parent=0 // pred_fallthru
    _

</llo_original>
